<compile_context>
chip_gen: v7x
topology: tpu7x:2x2x1
jax: 0.10.0
libtpu: 0.0.40
codegen_flags: <defaults>
</compile_context>

<pallas_src>
import math
import jax
import jax.numpy as jnp
from jax import lax
from jax.experimental import pallas as pl
from jax.experimental.pallas import tpu as pltpu

EPS = 1e-6


def _make_kernel(C_out, oh, ow, kh, kw, sh, sw):
    K = kh * kw

    def kernel(x_ref, w_ref, out_ref):
        # x_ref:   (H, C_in, W)      raw image slab (abs branch already log'd in glue)
        # w_ref:   (K, C_out, C_in)  fused stage1*stage2 weights for this branch
        # out_ref: (oh, C_out, ow)
        def row(y, carry):
            acc = jnp.zeros((C_out, ow), jnp.float32)
            for i in range(kh):                       # static unroll over kernel rows
                plane = x_ref[y * sh + i]             # (C_in, W) dynamic leading index
                for j in range(kw):                   # static unroll over kernel cols
                    win = plane[:, j: j + sw * (ow - 1) + 1: sw]   # (C_in, ow)
                    acc = acc + jnp.dot(w_ref[i * kw + j], win,
                                        preferred_element_type=jnp.float32)
            out_ref[y] = acc                          # (C_out, ow) at dynamic row y
            return carry

        lax.fori_loop(0, oh, row, 0)

        # branch 1 ("abs") accumulated in log space -> exponentiate once per block.
        @pl.when(pl.program_id(1) == 1)
        def _():
            out_ref[...] = jnp.exp(out_ref[...])

    return kernel


def complex_conv2d_effangle(x, w1, w2, kern_size, stride):
    """x: (B, 2, C_in, H, W); w1: (C_in, kh*kw); w2: (C_out, C_in). drop_prob=0 path."""
    B, two, C_in, H, W = x.shape
    assert two == 2
    kh, kw = kern_size
    sh, sw = stride
    oh = int(math.floor((H - (kh - 1) - 1) / sh + 1))
    ow = int(math.floor((W - (kw - 1) - 1) / sw + 1))
    K = kh * kw
    C_out = w2.shape[0]

    x = x.astype(jnp.float32)
    # log commutes with the unfold -> take it once on the raw abs-branch image
    # (C_in*H*W elements instead of C_in*K*L patch entries).
    x_rot = x[:, 0]
    x_abs = jnp.log(x[:, 1] + EPS)
    # (B, 2, C_in, H, W) -> (B*2, H, C_in, W): output-row axis leads so the kernel
    # indexes rows with a plain dynamic leading-axis ref load.
    xin = jnp.transpose(jnp.stack([x_rot, x_abs], axis=1), (0, 1, 3, 2, 4))
    xin = xin.reshape(B * 2, H, C_in, W)

    # ---- weight normalization + stage1/stage2 fusion (all tiny, done in glue) ----
    # TODO(synk): drop_prob > 0 (random Bernoulli weight dropout inside
    #             weightNormalize) not implemented; this matches drop_prob=0.0.
    w1 = w1.astype(jnp.float32)
    w2 = w2.astype(jnp.float32)
    w1g = w1 ** 2 / jnp.sum(w1 ** 2)                          # weightNormalize1
    w2g = w2 ** 2 / jnp.sum(w2 ** 2)                          # weightNormalize1
    w1r = w1 ** 2 / jnp.sum(w1 ** 2, axis=1, keepdims=True)   # weightNormalize (p=0)
    w2r = w2 ** 2 / jnp.sum(w2 ** 2, axis=1, keepdims=True)
    # fused per-tap weights: w[k, o, c] = w2norm[o, c] * w1norm[c, k]
    w_rot = jnp.transpose(w2g[:, :, None] * w1g[None, :, :], (2, 0, 1))  # (K,C_out,C_in)
    w_abs = jnp.transpose(w2r[:, :, None] * w1r[None, :, :], (2, 0, 1))
    w_fused = jnp.stack([w_rot, w_abs], axis=0)               # (2, K, C_out, C_in)

    kernel = _make_kernel(C_out, oh, ow, kh, kw, sh, sw)

    flops = 2 * B * 2 * C_out * C_in * K * oh * ow
    bytes_accessed = 4 * (B * 2 * C_in * H * W + 2 * K * C_out * C_in
                          + B * 2 * C_out * oh * ow)

    out = pl.pallas_call(
        kernel,
        out_shape=jax.ShapeDtypeStruct((B * 2, oh, C_out, ow), jnp.float32),
        grid_spec=pltpu.PrefetchScalarGridSpec(
            num_scalar_prefetch=0,
            grid=(B, 2),
            in_specs=[
                # one full (H, C_in, W) image slab per (batch, branch) step
                pl.BlockSpec((pl.Squeezed(), H, C_in, W),
                             lambda b, br: (b * 2 + br, 0, 0, 0)),
                # per-branch fused weights (tiny; re-fetched each step, ~1 KiB)
                pl.BlockSpec((pl.Squeezed(), K, C_out, C_in),
                             lambda b, br: (br, 0, 0, 0)),
            ],
            out_specs=pl.BlockSpec((pl.Squeezed(), oh, C_out, ow),
                                   lambda b, br: (b * 2 + br, 0, 0, 0)),
        ),
        compiler_params=pltpu.CompilerParams(
            dimension_semantics=("parallel", "parallel")),
        cost_estimate=pl.CostEstimate(
            flops=flops,
            transcendentals=B * C_out * oh * ow,
            bytes_accessed=bytes_accessed),
    )(xin, w_fused)

    # (B*2, oh, C_out, ow) -> (B, 2, C_out, oh, ow)
    out = out.reshape(B, 2, oh, C_out, ow)
    return jnp.transpose(out, (0, 1, 3, 2, 4))


def _reference(x, w1, w2, kern_size, stride):
    """Pure-JAX reference mirroring the PyTorch forward (drop_prob=0)."""
    B, _, C_in, H, W = x.shape
    kh, kw = kern_size
    sh, sw = stride
    oh = (H - kh) // sh + 1
    ow = (W - kw) // sw + 1
    K = kh * kw
    x4 = x.reshape(B * 2, C_in, H, W)
    cols = []
    for i in range(kh):
        for j in range(kw):
            cols.append(x4[:, :, i:i + sh * (oh - 1) + 1:sh, j:j + sw * (ow - 1) + 1:sw])
    p = jnp.stack(cols, axis=2).reshape(B, 2, C_in, K, oh * ow)
    rot, ab = p[:, 0], p[:, 1]
    w1g = w1 ** 2 / jnp.sum(w1 ** 2)
    w2g = w2 ** 2 / jnp.sum(w2 ** 2)
    w1r = w1 ** 2 / jnp.sum(w1 ** 2, axis=1, keepdims=True)
    w2r = w2 ** 2 / jnp.sum(w2 ** 2, axis=1, keepdims=True)
    r1 = jnp.einsum('bckl,ck->blc', rot, w1g)
    r2 = jnp.einsum('blc,oc->blo', r1, w2g).reshape(B, oh, ow, -1)
    a1 = jnp.einsum('bckl,ck->blc', jnp.log(ab + EPS), w1r)
    a2 = jnp.exp(jnp.einsum('blc,oc->blo', a1, w2r)).reshape(B, oh, ow, -1)
    r2 = jnp.transpose(r2, (0, 3, 1, 2))[:, None]
    a2 = jnp.transpose(a2, (0, 3, 1, 2))[:, None]
    return jnp.concatenate([r2, a2], axis=1)


if __name__ == "__main__":
    key = jax.random.PRNGKey(0)
    k_x, k_w1, k_w2 = jax.random.split(key, 3)

    B, C_in, C_out, H, W = 2, 4, 8, 16, 16
    kern_size, stride = (3, 3), (1, 1)

    # x: (B, 2, C_in, H, W); positive values (abs branch takes log)
    x = jax.random.uniform(k_x, (B, 2, C_in, H, W), jnp.float32, 0.1, 1.0)
    w1 = jax.random.uniform(k_w1, (C_in, kern_size[0] * kern_size[1]), jnp.float32)
    w2 = jax.random.uniform(k_w2, (C_out, C_in), jnp.float32)

    out = complex_conv2d_effangle(x, w1, w2, kern_size, stride)
    out = jax.block_until_ready(out)

    ref = _reference(x, w1, w2, kern_size, stride)
    assert out.shape == (B, 2, C_out, 14, 14), out.shape
    assert jnp.allclose(out, ref, rtol=1e-5, atol=1e-5), \
        float(jnp.max(jnp.abs(out - ref)))

    print("KERNEL_OK")
</pallas_src>

<mosaic_0001>
module attributes {stable_mosaic.version = 11 : i64} {
  func.func @kernel(%arg0: i32, %arg1: i32, %arg2: memref<1x16x4x16xf32, #tpu.memory_space<vmem>>, %arg3: memref<1x9x8x4xf32, #tpu.memory_space<vmem>>, %arg4: memref<1x14x8x14xf32, #tpu.memory_space<vmem>>) attributes {dimension_semantics = [#tpu.dimension_semantics<parallel>, #tpu.dimension_semantics<parallel>], iteration_bounds = array<i64: 2, 2>, scalar_prefetch = 0 : i64, scratch_operands = 0 : i64, tpu.core_type = #tpu.core_type<tc>, window_params = [{transform_indices = @transform_0, window_bounds = array<i64: 1, 16, 4, 16>}, {transform_indices = @transform_1, window_bounds = array<i64: 1, 9, 8, 4>}, {transform_indices = @transform_2, window_bounds = array<i64: 1, 14, 8, 14>}]} {
    %c0_i32 = arith.constant 0 : i32
    %c14_i32 = arith.constant 14 : i32
    %0 = arith.addi %c0_i32, %c14_i32 : i32
    %c1_i32 = arith.constant 1 : i32
    scf.for %arg5 = %c0_i32 to %0 step %c1_i32  : i32 {
      %cst = arith.constant 0.000000e+00 : f32
      %4 = vector.broadcast %cst : f32 to vector<8x14xf32>
      %c1_i32_3 = arith.constant 1 : i32
      %5 = arith.muli %arg5, %c1_i32_3 : i32
      %c0_i32_4 = arith.constant 0 : i32
      %6 = arith.addi %5, %c0_i32_4 : i32
      %c0 = arith.constant 0 : index
      %7 = arith.index_cast %6 : i32 to index
      %c0_5 = arith.constant 0 : index
      %c0_6 = arith.constant 0 : index
      %8 = vector.load %arg2[%c0, %7, %c0_5, %c0_6] : memref<1x16x4x16xf32, #tpu.memory_space<vmem>>, vector<1x1x4x16xf32>
      %9 = vector.shape_cast %8 : vector<1x1x4x16xf32> to vector<4x16xf32>
      %10 = vector.extract_strided_slice %9 {offsets = [0, 0], sizes = [4, 14], strides = [1, 1]} : vector<4x16xf32> to vector<4x14xf32>
      %c0_7 = arith.constant 0 : index
      %c0_8 = arith.constant 0 : index
      %c0_9 = arith.constant 0 : index
      %c0_10 = arith.constant 0 : index
      %11 = vector.load %arg3[%c0_7, %c0_8, %c0_9, %c0_10] : memref<1x9x8x4xf32, #tpu.memory_space<vmem>>, vector<1x1x8x4xf32>
      %12 = vector.shape_cast %11 : vector<1x1x8x4xf32> to vector<8x4xf32>
      %cst_11 = arith.constant dense<0.000000e+00> : vector<8x14xf32>
      %13 = tpu.matmul %12, %10, %cst_11 {dimension_numbers = #tpu.dot_dimension_numbers<[1], [0], [0], [1], [0, 0, 1, 1], [], []>} : vector<8x4xf32>, vector<4x14xf32>, vector<8x14xf32> -> vector<8x14xf32>
      %14 = arith.addf %4, %13 : vector<8x14xf32>
      %15 = vector.extract_strided_slice %9 {offsets = [0, 1], sizes = [4, 14], strides = [1, 1]} : vector<4x16xf32> to vector<4x14xf32>
      %c0_12 = arith.constant 0 : index
      %c1 = arith.constant 1 : index
      %c0_13 = arith.constant 0 : index
      %c0_14 = arith.constant 0 : index
      %16 = vector.load %arg3[%c0_12, %c1, %c0_13, %c0_14] : memref<1x9x8x4xf32, #tpu.memory_space<vmem>>, vector<1x1x8x4xf32>
      %17 = vector.shape_cast %16 : vector<1x1x8x4xf32> to vector<8x4xf32>
      %cst_15 = arith.constant dense<0.000000e+00> : vector<8x14xf32>
      %18 = tpu.matmul %17, %15, %cst_15 {dimension_numbers = #tpu.dot_dimension_numbers<[1], [0], [0], [1], [0, 0, 1, 1], [], []>} : vector<8x4xf32>, vector<4x14xf32>, vector<8x14xf32> -> vector<8x14xf32>
      %19 = arith.addf %14, %18 : vector<8x14xf32>
      %20 = vector.extract_strided_slice %9 {offsets = [0, 2], sizes = [4, 14], strides = [1, 1]} : vector<4x16xf32> to vector<4x14xf32>
      %c0_16 = arith.constant 0 : index
      %c2 = arith.constant 2 : index
      %c0_17 = arith.constant 0 : index
      %c0_18 = arith.constant 0 : index
      %21 = vector.load %arg3[%c0_16, %c2, %c0_17, %c0_18] : memref<1x9x8x4xf32, #tpu.memory_space<vmem>>, vector<1x1x8x4xf32>
      %22 = vector.shape_cast %21 : vector<1x1x8x4xf32> to vector<8x4xf32>
      %cst_19 = arith.constant dense<0.000000e+00> : vector<8x14xf32>
      %23 = tpu.matmul %22, %20, %cst_19 {dimension_numbers = #tpu.dot_dimension_numbers<[1], [0], [0], [1], [0, 0, 1, 1], [], []>} : vector<8x4xf32>, vector<4x14xf32>, vector<8x14xf32> -> vector<8x14xf32>
      %24 = arith.addf %19, %23 : vector<8x14xf32>
      %c1_i32_20 = arith.constant 1 : i32
      %25 = arith.muli %arg5, %c1_i32_20 : i32
      %c1_i32_21 = arith.constant 1 : i32
      %26 = arith.addi %25, %c1_i32_21 : i32
      %c0_22 = arith.constant 0 : index
      %27 = arith.index_cast %26 : i32 to index
      %c0_23 = arith.constant 0 : index
      %c0_24 = arith.constant 0 : index
      %28 = vector.load %arg2[%c0_22, %27, %c0_23, %c0_24] : memref<1x16x4x16xf32, #tpu.memory_space<vmem>>, vector<1x1x4x16xf32>
      %29 = vector.shape_cast %28 : vector<1x1x4x16xf32> to vector<4x16xf32>
      %30 = vector.extract_strided_slice %29 {offsets = [0, 0], sizes = [4, 14], strides = [1, 1]} : vector<4x16xf32> to vector<4x14xf32>
      %c0_25 = arith.constant 0 : index
      %c3 = arith.constant 3 : index
      %c0_26 = arith.constant 0 : index
      %c0_27 = arith.constant 0 : index
      %31 = vector.load %arg3[%c0_25, %c3, %c0_26, %c0_27] : memref<1x9x8x4xf32, #tpu.memory_space<vmem>>, vector<1x1x8x4xf32>
      %32 = vector.shape_cast %31 : vector<1x1x8x4xf32> to vector<8x4xf32>
      %cst_28 = arith.constant dense<0.000000e+00> : vector<8x14xf32>
      %33 = tpu.matmul %32, %30, %cst_28 {dimension_numbers = #tpu.dot_dimension_numbers<[1], [0], [0], [1], [0, 0, 1, 1], [], []>} : vector<8x4xf32>, vector<4x14xf32>, vector<8x14xf32> -> vector<8x14xf32>
      %34 = arith.addf %24, %33 : vector<8x14xf32>
      %35 = vector.extract_strided_slice %29 {offsets = [0, 1], sizes = [4, 14], strides = [1, 1]} : vector<4x16xf32> to vector<4x14xf32>
      %c0_29 = arith.constant 0 : index
      %c4 = arith.constant 4 : index
      %c0_30 = arith.constant 0 : index
      %c0_31 = arith.constant 0 : index
      %36 = vector.load %arg3[%c0_29, %c4, %c0_30, %c0_31] : memref<1x9x8x4xf32, #tpu.memory_space<vmem>>, vector<1x1x8x4xf32>
      %37 = vector.shape_cast %36 : vector<1x1x8x4xf32> to vector<8x4xf32>
      %cst_32 = arith.constant dense<0.000000e+00> : vector<8x14xf32>
      %38 = tpu.matmul %37, %35, %cst_32 {dimension_numbers = #tpu.dot_dimension_numbers<[1], [0], [0], [1], [0, 0, 1, 1], [], []>} : vector<8x4xf32>, vector<4x14xf32>, vector<8x14xf32> -> vector<8x14xf32>
      %39 = arith.addf %34, %38 : vector<8x14xf32>
      %40 = vector.extract_strided_slice %29 {offsets = [0, 2], sizes = [4, 14], strides = [1, 1]} : vector<4x16xf32> to vector<4x14xf32>
      %c0_33 = arith.constant 0 : index
      %c5 = arith.constant 5 : index
      %c0_34 = arith.constant 0 : index
      %c0_35 = arith.constant 0 : index
      %41 = vector.load %arg3[%c0_33, %c5, %c0_34, %c0_35] : memref<1x9x8x4xf32, #tpu.memory_space<vmem>>, vector<1x1x8x4xf32>
      %42 = vector.shape_cast %41 : vector<1x1x8x4xf32> to vector<8x4xf32>
      %cst_36 = arith.constant dense<0.000000e+00> : vector<8x14xf32>
      %43 = tpu.matmul %42, %40, %cst_36 {dimension_numbers = #tpu.dot_dimension_numbers<[1], [0], [0], [1], [0, 0, 1, 1], [], []>} : vector<8x4xf32>, vector<4x14xf32>, vector<8x14xf32> -> vector<8x14xf32>
      %44 = arith.addf %39, %43 : vector<8x14xf32>
      %c1_i32_37 = arith.constant 1 : i32
      %45 = arith.muli %arg5, %c1_i32_37 : i32
      %c2_i32 = arith.constant 2 : i32
      %46 = arith.addi %45, %c2_i32 : i32
      %c0_38 = arith.constant 0 : index
      %47 = arith.index_cast %46 : i32 to index
      %c0_39 = arith.constant 0 : index
      %c0_40 = arith.constant 0 : index
      %48 = vector.load %arg2[%c0_38, %47, %c0_39, %c0_40] : memref<1x16x4x16xf32, #tpu.memory_space<vmem>>, vector<1x1x4x16xf32>
      %49 = vector.shape_cast %48 : vector<1x1x4x16xf32> to vector<4x16xf32>
      %50 = vector.extract_strided_slice %49 {offsets = [0, 0], sizes = [4, 14], strides = [1, 1]} : vector<4x16xf32> to vector<4x14xf32>
      %c0_41 = arith.constant 0 : index
      %c6 = arith.constant 6 : index
      %c0_42 = arith.constant 0 : index
      %c0_43 = arith.constant 0 : index
      %51 = vector.load %arg3[%c0_41, %c6, %c0_42, %c0_43] : memref<1x9x8x4xf32, #tpu.memory_space<vmem>>, vector<1x1x8x4xf32>
      %52 = vector.shape_cast %51 : vector<1x1x8x4xf32> to vector<8x4xf32>
      %cst_44 = arith.constant dense<0.000000e+00> : vector<8x14xf32>
      %53 = tpu.matmul %52, %50, %cst_44 {dimension_numbers = #tpu.dot_dimension_numbers<[1], [0], [0], [1], [0, 0, 1, 1], [], []>} : vector<8x4xf32>, vector<4x14xf32>, vector<8x14xf32> -> vector<8x14xf32>
      %54 = arith.addf %44, %53 : vector<8x14xf32>
      %55 = vector.extract_strided_slice %49 {offsets = [0, 1], sizes = [4, 14], strides = [1, 1]} : vector<4x16xf32> to vector<4x14xf32>
      %c0_45 = arith.constant 0 : index
      %c7 = arith.constant 7 : index
      %c0_46 = arith.constant 0 : index
      %c0_47 = arith.constant 0 : index
      %56 = vector.load %arg3[%c0_45, %c7, %c0_46, %c0_47] : memref<1x9x8x4xf32, #tpu.memory_space<vmem>>, vector<1x1x8x4xf32>
      %57 = vector.shape_cast %56 : vector<1x1x8x4xf32> to vector<8x4xf32>
      %cst_48 = arith.constant dense<0.000000e+00> : vector<8x14xf32>
      %58 = tpu.matmul %57, %55, %cst_48 {dimension_numbers = #tpu.dot_dimension_numbers<[1], [0], [0], [1], [0, 0, 1, 1], [], []>} : vector<8x4xf32>, vector<4x14xf32>, vector<8x14xf32> -> vector<8x14xf32>
      %59 = arith.addf %54, %58 : vector<8x14xf32>
      %60 = vector.extract_strided_slice %49 {offsets = [0, 2], sizes = [4, 14], strides = [1, 1]} : vector<4x16xf32> to vector<4x14xf32>
      %c0_49 = arith.constant 0 : index
      %c8 = arith.constant 8 : index
      %c0_50 = arith.constant 0 : index
      %c0_51 = arith.constant 0 : index
      %61 = vector.load %arg3[%c0_49, %c8, %c0_50, %c0_51] : memref<1x9x8x4xf32, #tpu.memory_space<vmem>>, vector<1x1x8x4xf32>
      %62 = vector.shape_cast %61 : vector<1x1x8x4xf32> to vector<8x4xf32>
      %cst_52 = arith.constant dense<0.000000e+00> : vector<8x14xf32>
      %63 = tpu.matmul %62, %60, %cst_52 {dimension_numbers = #tpu.dot_dimension_numbers<[1], [0], [0], [1], [0, 0, 1, 1], [], []>} : vector<8x4xf32>, vector<4x14xf32>, vector<8x14xf32> -> vector<8x14xf32>
      %64 = arith.addf %59, %63 : vector<8x14xf32>
      %c0_53 = arith.constant 0 : index
      %65 = arith.index_cast %arg5 : i32 to index
      %c0_54 = arith.constant 0 : index
      %c0_55 = arith.constant 0 : index
      %66 = vector.load %arg4[%c0_53, %65, %c0_54, %c0_55] : memref<1x14x8x14xf32, #tpu.memory_space<vmem>>, vector<1x1x8x14xf32>
      %67 = vector.shape_cast %66 : vector<1x1x8x14xf32> to vector<8x14xf32>
      %68 = vector.shape_cast %64 : vector<8x14xf32> to vector<1x1x8x14xf32>
      tpu.vector_store %arg4[%c0_53, %65, %c0_54, %c0_55], %68 {strides = array<i32>} : memref<1x14x8x14xf32, #tpu.memory_space<vmem>>, vector<1x1x8x14xf32>,
    }
    %c14_i32_0 = arith.constant 14 : i32
    %c1_i32_1 = arith.constant 1 : i32
    %1 = arith.cmpi eq, %arg1, %c1_i32_1 : i32
    %2 = arith.extui %1 : i1 to i32
    %c0_i32_2 = arith.constant 0 : i32
    %3 = arith.cmpi ne, %2, %c0_i32_2 : i32
    scf.if %3 {
      %c0 = arith.constant 0 : index
      %c0_3 = arith.constant 0 : index
      %c0_4 = arith.constant 0 : index
      %c0_5 = arith.constant 0 : index
      %4 = vector.load %arg4[%c0, %c0_3, %c0_4, %c0_5] : memref<1x14x8x14xf32, #tpu.memory_space<vmem>>, vector<1x14x8x14xf32>
      %5 = vector.shape_cast %4 : vector<1x14x8x14xf32> to vector<14x8x14xf32>
      %6 = math.exp %5 : vector<14x8x14xf32>
      %c0_6 = arith.constant 0 : index
      %c0_7 = arith.constant 0 : index
      %c0_8 = arith.constant 0 : index
      %c0_9 = arith.constant 0 : index
      %7 = vector.load %arg4[%c0_6, %c0_7, %c0_8, %c0_9] : memref<1x14x8x14xf32, #tpu.memory_space<vmem>>, vector<1x14x8x14xf32>
      %8 = vector.shape_cast %7 : vector<1x14x8x14xf32> to vector<14x8x14xf32>
      %9 = vector.shape_cast %6 : vector<14x8x14xf32> to vector<1x14x8x14xf32>
      tpu.vector_store %arg4[%c0_6, %c0_7, %c0_8, %c0_9], %9 {strides = array<i32>} : memref<1x14x8x14xf32, #tpu.memory_space<vmem>>, vector<1x14x8x14xf32>,
    } else {
    }
    return
  }
  func.func @transform_0(%arg0: i32, %arg1: i32) -> (i32, i32, i32, i32) {
    %c2_i32 = arith.constant 2 : i32
    %0 = arith.muli %arg0, %c2_i32 : i32
    %1 = arith.addi %0, %arg1 : i32
    %c0_i32 = arith.constant 0 : i32
    %c0_i32_0 = arith.constant 0 : i32
    %c0_i32_1 = arith.constant 0 : i32
    %c0_i32_2 = arith.constant 0 : i32
    return %1, %c0_i32, %c0_i32_0, %c0_i32_1 : i32, i32, i32, i32
  }
  func.func @transform_1(%arg0: i32, %arg1: i32) -> (i32, i32, i32, i32) {
    %c0_i32 = arith.constant 0 : i32
    %c0_i32_0 = arith.constant 0 : i32
    %c0_i32_1 = arith.constant 0 : i32
    %c0_i32_2 = arith.constant 0 : i32
    return %arg1, %c0_i32, %c0_i32_0, %c0_i32_1 : i32, i32, i32, i32
  }
  func.func @transform_2(%arg0: i32, %arg1: i32) -> (i32, i32, i32, i32) {
    %c2_i32 = arith.constant 2 : i32
    %0 = arith.muli %arg0, %c2_i32 : i32
    %1 = arith.addi %0, %arg1 : i32
    %c0_i32 = arith.constant 0 : i32
    %c0_i32_0 = arith.constant 0 : i32
    %c0_i32_1 = arith.constant 0 : i32
    %c0_i32_2 = arith.constant 0 : i32
    return %1, %c0_i32, %c0_i32_0, %c0_i32_1 : i32, i32, i32, i32
  }
}

</mosaic_0001>

<llo_original>
// kernel: tpu_custom_call.1
$region0: #{tpu_custom_call.1}
  #allocation0 [shape = 'u32[]', space=smem, size = 0x4, offset = 0x4, fixed_abs, tag = 'smem constant byte address 0x4 - core index']
  #allocation1 [shape = 'u32[144,128]{1,0:T(1,128)}', space=vmem, size = 0x12000, scoped, tag = 'internal scratch']
  %s0 = inlined_call_operand.hbm [shape: f32[4,16,4,16], index: 0, kind: input, shape index: {}]
  %s1 = inlined_call_operand.vmem [shape: f32[2,9,8,4], index: 1, kind: input, shape index: {}]
  %s2 = inlined_call_operand.hbm [shape: f32[4,14,8,14], index: 2, kind: output, shape index: {}]
  %s3 = sld [smem:[#allocation0]]
  $region56: #{tpu_custom_call.1} parent=0
    _
  %s5 = ssub.s32 1, %s3
  %s6 = scalar_select 0, %s5, %s3
  $region1: #{tpu_custom_call.1} parent=0
    #allocation2 [shape = 'u8[65536]{0}', space=vmem, size = 0x10000, scoped, tag = 'input window, operand 0']
    #allocation3 [shape = 's32[2]{0}', space=sflag, size = 0x8, scoped, tag = 'scoped memory for tpu_custom_call.1']
    #allocation4 [shape = 's32[2]{0}', space=sflag, size = 0x8, scoped, tag = 'scoped memory for tpu_custom_call.1']
    #allocation5 [shape = 'u8[114688]{0}', space=vmem, size = 0x1c000, scoped, tag = 'output window, operand 0']
    %7 = vsyncpa [#allocation3], 0
    %s8 = scalar_lea.sflag [#allocation3], 1
    %9 = vsyncpa %s8, 0
    %10 = vsyncpa [#allocation4], 0
    %s11 = scalar_lea.sflag [#allocation4], 1
    %12 = vsyncpa %s11, 0
    loop: start=0, step=1, limit=6
    $region2: #{tpu_custom_call.1} parent=1 // loop_pre_header
      _
    $region3: #{tpu_custom_call.1} parent=1 // loop_header
      %s14 = sphi 0, %s18
      %p15 = scmp.ge.s32.totalorder %s14, 6
      %s21 = sphi 0, %s33
      %s22 = sphi 0, %s29
      %s23 = sphi 0, %s21
      %s24 = sphi 0, %s22
      %s25 = sphi 0, %s23
      %s26 = sphi 0, %s24
      %s40 = sphi 0, %s42
      %s43 = sphi 0, %s40
      %s44 = sphi 0, %s43
      %s60 = sphi 0, %s44
      %s66 = sphi 0, %s68
      %s69 = sphi 0, %s66
      %s70 = sphi 0, %s69
      %s86 = sphi 0, %s70
      %s96 = sphi 0, %s98
      %s99 = sphi 0, %s96
      %s100 = sphi 0, %s99
      %s116 = sphi 0, %s100
    $region4: #{tpu_custom_call.1} parent=1 // loop_header_branch
      %17 = sbr.rel (%p15) target = $region8
    $region5: #{tpu_custom_call.1} parent=1 // loop_body
      %s19 = ssub.s32 %s14, 1
      %s20 = ssub.s32 %s14, 2
      %s27 = sadd.s32 1, %s22
      %p28 = scmp.ge.s32.totalorder %s27, 2
      %s29 = scalar_select %p28, 0, %s27
      %s30 = sadd.s32 1, %s21
      %s31 = scalar_select %p28, %s30, %s21
      %p32 = scmp.ge.s32.totalorder %s31, 2
      %s33 = scalar_select %p32, 0, %s31
      %s34 = smul.u32 %s21, 2
      %s35 = sadd.s32 %s34, %s22
      %s36 = smul.u32 %s33, 2
      %s37 = sadd.s32 %s36, %s29
      %s38 = ssub.s32 %s35, %s37
      %p39 = scmp.eq.s32.totalorder %s38, 0
      %s41 = sadd.s32 %s40, 1
      %s42 = scalar_select %p39, %s40, %s41
      %p45 = pneg %p39
      %p46 = scmp.eq.s32.totalorder %s14, 3
      %p47 = por %p45, %p46
      %p48 = scmp.ne.s32.totalorder %s40, %s43
      %p49 = scmp.eq.s32.totalorder %s14, 0
      %p50 = por %p48, %p49
      %p51 = scmp.ne.s32.totalorder %s40, %s43
      %p52 = scmp.eq.s32.totalorder %s19, 3
      %p53 = por %p51, %p52
      %p54 = scmp.ne.s32.totalorder %s43, %s44
      %p55 = scmp.eq.s32.totalorder %s19, 0
      %p56 = por %p54, %p55
      %p57 = scmp.ne.s32.totalorder %s43, %s44
      %p58 = scmp.eq.s32.totalorder %s20, 3
      %p59 = por %p57, %p58
      %p61 = scmp.ne.s32.totalorder %s44, %s60
      %p62 = scmp.eq.s32.totalorder %s20, 0
      %p63 = por %p61, %p62
      %s64 = ssub.s32 %s22, %s29
      %p65 = scmp.eq.s32.totalorder %s64, 0
      %s67 = sadd.s32 %s66, 1
      %s68 = scalar_select %p65, %s66, %s67
      %p71 = pneg %p65
      %p72 = scmp.eq.s32.totalorder %s14, 3
      %p73 = por %p71, %p72
      %p74 = scmp.ne.s32.totalorder %s66, %s69
      %p75 = scmp.eq.s32.totalorder %s14, 0
      %p76 = por %p74, %p75
      %p77 = scmp.ne.s32.totalorder %s66, %s69
      %p78 = scmp.eq.s32.totalorder %s19, 3
      %p79 = por %p77, %p78
      %p80 = scmp.ne.s32.totalorder %s69, %s70
      %p81 = scmp.eq.s32.totalorder %s19, 0
      %p82 = por %p80, %p81
      %p83 = scmp.ne.s32.totalorder %s69, %s70
      %p84 = scmp.eq.s32.totalorder %s20, 3
      %p85 = por %p83, %p84
      %p87 = scmp.ne.s32.totalorder %s70, %s86
      %p88 = scmp.eq.s32.totalorder %s20, 0
      %p89 = por %p87, %p88
      %s90 = smul.u32 %s21, 2
      %s91 = sadd.s32 %s90, %s22
      %s92 = smul.u32 %s33, 2
      %s93 = sadd.s32 %s92, %s29
      %s94 = ssub.s32 %s91, %s93
      %p95 = scmp.eq.s32.totalorder %s94, 0
      %s97 = sadd.s32 %s96, 1
      %s98 = scalar_select %p95, %s96, %s97
      %p101 = pneg %p95
      %p102 = scmp.eq.s32.totalorder %s14, 3
      %p103 = por %p101, %p102
      %p104 = scmp.ne.s32.totalorder %s96, %s99
      %p105 = scmp.eq.s32.totalorder %s14, 0
      %p106 = por %p104, %p105
      %p107 = scmp.ne.s32.totalorder %s96, %s99
      %p108 = scmp.eq.s32.totalorder %s19, 3
      %p109 = por %p107, %p108
      %p110 = scmp.ne.s32.totalorder %s99, %s100
      %p111 = scmp.eq.s32.totalorder %s19, 0
      %p112 = por %p110, %p111
      %p113 = scmp.ne.s32.totalorder %s99, %s100
      %p114 = scmp.eq.s32.totalorder %s20, 3
      %p115 = por %p113, %p114
      %p117 = scmp.ne.s32.totalorder %s100, %s116
      %p118 = scmp.eq.s32.totalorder %s20, 0
      %p119 = por %p117, %p118
      %p120 = scmp.le.s32.totalorder 1, %s14
      %p121 = scmp.lt.s32.totalorder %s14, 5
      %p122 = pnand %p120, %p121
      %p123 = pneg %p122
      // Predicated region
      $region9: #{tpu_custom_call.1} parent=5 // pred_check
        _
      $region10: #{tpu_custom_call.1} parent=5 // pred_check_branch
        %125 = sbr.rel (%p122) target = $region12
      $region11: #{tpu_custom_call.1} parent=5 // pred_region
        %s126 = ssub.s32 %s14, 1
      $region12: #{tpu_custom_call.1} parent=5 // pred_fallthru
        _
      %p127 = scmp.lt.s32.totalorder %s14, 4
      // Predicated region
      $region13: #{tpu_custom_call.1} parent=5 // pred_check
        %p128 = pneg %p127
      $region14: #{tpu_custom_call.1} parent=5 // pred_check_branch
        %130 = sbr.rel (%p128) target = $region16
      $region15: #{tpu_custom_call.1} parent=5 // pred_region
        // Predicated region
        $region17: #{tpu_custom_call.1} parent=15 // pred_check
          %p131 = pneg %p50
        $region18: #{tpu_custom_call.1} parent=15 // pred_check_branch
          %133 = sbr.rel (%p131) target = $region20
        $region19: #{tpu_custom_call.1} parent=15 // pred_region
          %s134 = sand.u32 %s40, 1
          %s135 = scalar_lea.sflag [#allocation3], %s134
          %s136 = sand.u32 %s40, 1
          %s137 = smul.addr %s136, 64
          %s138 = scalar_lea.vmem [#allocation2], %s137
          %s139 = smul.u32 %s21, 2
          %s140 = sadd.s32 %s139, %s22
          %s142 = ssub.s32 1024, 1024
          %143 = vsyncadd %s135, %s142
          %s144 = smul.addr %s140, 16
          %s145 = smul.addr %s144, 64
          %s146 = scalar_lea.hbm %s0, %s145
          %s147 = sshll.u32 %s138, 4
          %s148 = int_to_ptr.vmem [resolvable:$true] %s147
          %153 = dma.hbm_to_vmem [thread:$0]  %s146, 1024, %s148, %s135, 64, 64, 4
        $region20: #{tpu_custom_call.1} parent=15 // pred_fallthru
          _
        // Predicated region
        $region21: #{tpu_custom_call.1} parent=15 // pred_check
          %p154 = pneg %p76
        $region22: #{tpu_custom_call.1} parent=15 // pred_check_branch
          %156 = sbr.rel (%p154) target = $region24
        $region23: #{tpu_custom_call.1} parent=15 // pred_region
          %p157 = scmp.lt.s32.totalorder %s22, 1
          %s158 = scalar_select %p157, %s22, 1
          %s159 = smul.addr %s158, 9
          %s160 = smul.addr %s159, 8
          %s161 = scalar_lea.vmem %s1, %s160
        $region24: #{tpu_custom_call.1} parent=15 // pred_fallthru
          _
      $region16: #{tpu_custom_call.1} parent=5 // pred_fallthru
        _
      %p162 = scmp.le.s32.totalorder 1, %s14
      %p163 = scmp.lt.s32.totalorder %s14, 5
      %p164 = pnand %p162, %p163
      %p165 = pneg %p164
      // Predicated region
      $region25: #{tpu_custom_call.1} parent=5 // pred_check
        _
      $region26: #{tpu_custom_call.1} parent=5 // pred_check_branch
        %167 = sbr.rel (%p164) target = $region28
      $region27: #{tpu_custom_call.1} parent=5 // pred_region
        %s168 = ssub.s32 %s14, 1
        %s169 = sand.u32 %s43, 1
        %s170 = scalar_lea.sflag [#allocation3], %s169
        %s171 = sand.u32 %s43, 1
        %s172 = smul.addr %s171, 64
        %s173 = scalar_lea.vmem [#allocation2], %s172
        // Predicated region
        $region29: #{tpu_custom_call.1} parent=27 // pred_check
          %p174 = pneg %p56
        $region30: #{tpu_custom_call.1} parent=27 // pred_check_branch
          %176 = sbr.rel (%p174) target = $region32
        $region31: #{tpu_custom_call.1} parent=27 // pred_region
          %177 = dma.done %s170, 1024
        $region32: #{tpu_custom_call.1} parent=27 // pred_fallthru
          _
        %s178 = sand.u32 %s43, 1
        %s179 = scalar_lea.sflag [#allocation3], %s178
        %s180 = sand.u32 %s43, 1
        %s181 = smul.addr %s180, 64
        %s182 = scalar_lea.vmem [#allocation2], %s181
        %p183 = pneg %p56
        %p184 = pneg %p53
        %p185 = scmp.lt.s32.totalorder %s24, 1
        %s186 = scalar_select %p185, %s24, 1
        %s187 = smul.addr %s186, 9
        %s188 = smul.addr %s187, 8
        %s189 = scalar_lea.vmem %s1, %s188
        %p190 = pneg %p82
        %p191 = pneg %p79
        %p192 = pneg %p112
        %p193 = pneg %p109
        %s194 = sand.u32 %s99, 1
        %s195 = scalar_lea.sflag [#allocation4], %s194
        %s196 = sand.u32 %s99, 1
        %s197 = smul.addr %s196, 112
        %s198 = scalar_lea.vmem [#allocation5], %s197
        %s199 = smul.u32 %s23, 2
        %s200 = sadd.s32 %s199, %s24
        %p201 = scmp.lt.s32.totalorder %s24, 1
        %s202 = scalar_select %p201, %s24, 1
        %s203 = smul.addr %s202, 9
        %s204 = smul.addr %s203, 8
        %s205 = scalar_lea.vmem %s1, %s204
        %s206 = smul.u32 %s23, 2
        %s207 = sadd.s32 %s206, %s24
        loop: start=0, step=1, limit=14
        $region33: #{tpu_custom_call.1} parent=27 // loop_pre_header
          _
        $region34: #{tpu_custom_call.1} parent=27 // loop_header
          %s209 = sphi 0, %s213
          %p210 = scmp.ge.s32.totalorder %s209, 14
        $region35: #{tpu_custom_call.1} parent=27 // loop_header_branch
          %212 = sbr.rel (%p210) target = $region39
        $region36: #{tpu_custom_call.1} parent=27 // loop_body
          %s214 = smul.u32 %s209, 4
          %s215 = scalar_lea.vmem %s173, %s214 [#allocation2]
          %v216 = vld [vmem:[%s215] sm:$0xf]
          %v217 = vld [vmem:[%s205] sm:$0xff]
          %s218 = scalar_lea.vmem %s205, 8
          %v219 = vld [vmem:[%s218] sm:$0xff]
          %221 = vrot.lane.b32.xlu0 %v216, 127
          %v222 = vpop.permute.xlu0 %221
          %vm223 = vcmask 31744
          %v225 = vsel %vm223, %v219, 0
          %vm227 = vcmask 1043456
          %v228 = vsel %vm227, %v222, 0
          %230 = vmatprep.subr.mxu0 0.0
          %231 = vmatpush1.msra.mxu0 %v228
          %232 = vmatprep.subr.mxu0 0.0
          %233 = vmatpush1.msra.mxu0 0.0
          %234 = vmatprep.subr.mxu0 0.0
          %235 = vmatpush1.msra.mxu0 0.0
          %236 = vmatprep.subr.mxu0 0.0
          %237 = vmatpush1.msra.mxu0 0.0
          %238 = vmatprep.subr.mxu0 0.0
          %239 = vmatpush1.msra.mxu0 0.0
          %240 = vmatprep.subr.mxu0 0.0
          %241 = vmatpush1.msra.mxu0 0.0
          %242 = vmatprep.subr.mxu0 0.0
          %243 = vmatpush1.msra.mxu0 0.0
          %244 = vmatprep.subr.mxu0 0.0
          %245 = vmatpush1.msra.mxu0 0.0
          %246 = vmatprep.subr.mxu0 0.0
          %247 = vmatpush1.msra.mxu0 0.0
          %248 = vmatprep.subr.mxu0 0.0
          %249 = vmatpush1.msra.mxu0 0.0
          %250 = vmatprep.subr.mxu0 0.0
          %251 = vmatpush1.msra.mxu0 0.0
          %252 = vmatprep.subr.mxu0 0.0
          %253 = vmatpush1.msra.mxu0 0.0
          %254 = vmatprep.subr.mxu0 0.0
          %255 = vmatpush1.msra.mxu0 0.0
          %256 = vmatprep.subr.mxu0 0.0
          %257 = vmatpush1.msra.mxu0 0.0
          %258 = vmatprep.subr.mxu0 0.0
          %259 = vmatpush1.msra.mxu0 0.0
          %260 = vmatprep.subr.mxu0 0.0
          %261 = vmatpush1.msra.mxu0 0.0
          %262 = vmatprep.subr.mxu0 0.0
          %263 = vmatpush1.msra.mxu0 0.0
          %264 = vmatprep.subr.mxu0 0.0
          %265 = vmatpush1.msra.mxu0 0.0
          %266 = vmatprep.subr.mxu0 0.0
          %267 = vmatpush1.msra.mxu0 0.0
          %268 = vmatprep.subr.mxu0 0.0
          %269 = vmatpush1.msra.mxu0 0.0
          %270 = vmatprep.subr.mxu0 0.0
          %271 = vmatpush1.msra.mxu0 0.0
          %272 = vmatprep.subr.mxu0 0.0
          %273 = vmatpush1.msra.mxu0 0.0
          %274 = vmatprep.subr.mxu0 0.0
          %275 = vmatpush1.msra.mxu0 0.0
          %276 = vmatprep.subr.mxu0 0.0
          %277 = vmatpush1.msra.mxu0 0.0
          %278 = vmatprep.subr.mxu0 0.0
          %279 = vmatpush1.msra.mxu0 0.0
          %280 = vmatprep.subr.mxu0 0.0
          %281 = vmatpush1.msra.mxu0 0.0
          %282 = vmatprep.subr.mxu0 0.0
          %283 = vmatpush1.msra.mxu0 0.0
          %284 = vmatprep.subr.mxu0 0.0
          %285 = vmatpush1.msra.mxu0 0.0
          %286 = vmatprep.subr.mxu0 0.0
          %287 = vmatpush1.msra.mxu0 0.0
          %288 = vmatprep.subr.mxu0 0.0
          %289 = vmatpush1.msra.mxu0 0.0
          %290 = vmatprep.subr.mxu0 0.0
          %291 = vmatpush1.msra.mxu0 0.0
          %292 = vmatprep.subr.mxu0 0.0
          %293 = vmatpush1.msra.mxu0 0.0
          %294 = vmatprep.mubr.f32.mxu0 0.0
          %295 = vmatmul.mubr.f32.gmra.mrb[0].mxu0 %v225
          %v296 = vpop.f32.mrb[0].mxu0
          %v297 = vadd.f32 0.0, %v296
          %v298 = vpop.f32.mrb[0].mxu0
          %299 = vdwg.mxu0
          %v301 = vsel %vm223, %v217, 0
          %v303 = vsel %vm227, %v216, 0
          %305 = vmatprep.subr.mxu0 0.0
          %306 = vmatpush1.msra.mxu0 %v303
          %307 = vmatprep.subr.mxu0 0.0
          %308 = vmatpush1.msra.mxu0 0.0
          %309 = vmatprep.subr.mxu0 0.0
          %310 = vmatpush1.msra.mxu0 0.0
          %311 = vmatprep.subr.mxu0 0.0
          %312 = vmatpush1.msra.mxu0 0.0
          %313 = vmatprep.subr.mxu0 0.0
          %314 = vmatpush1.msra.mxu0 0.0
          %315 = vmatprep.subr.mxu0 0.0
          %316 = vmatpush1.msra.mxu0 0.0
          %317 = vmatprep.subr.mxu0 0.0
          %318 = vmatpush1.msra.mxu0 0.0
          %319 = vmatprep.subr.mxu0 0.0
          %320 = vmatpush1.msra.mxu0 0.0
          %321 = vmatprep.subr.mxu0 0.0
          %322 = vmatpush1.msra.mxu0 0.0
          %323 = vmatprep.subr.mxu0 0.0
          %324 = vmatpush1.msra.mxu0 0.0
          %325 = vmatprep.subr.mxu0 0.0
          %326 = vmatpush1.msra.mxu0 0.0
          %327 = vmatprep.subr.mxu0 0.0
          %328 = vmatpush1.msra.mxu0 0.0
          %329 = vmatprep.subr.mxu0 0.0
          %330 = vmatpush1.msra.mxu0 0.0
          %331 = vmatprep.subr.mxu0 0.0
          %332 = vmatpush1.msra.mxu0 0.0
          %333 = vmatprep.subr.mxu0 0.0
          %334 = vmatpush1.msra.mxu0 0.0
          %335 = vmatprep.subr.mxu0 0.0
          %336 = vmatpush1.msra.mxu0 0.0
          %337 = vmatprep.subr.mxu0 0.0
          %338 = vmatpush1.msra.mxu0 0.0
          %339 = vmatprep.subr.mxu0 0.0
          %340 = vmatpush1.msra.mxu0 0.0
          %341 = vmatprep.subr.mxu0 0.0
          %342 = vmatpush1.msra.mxu0 0.0
          %343 = vmatprep.subr.mxu0 0.0
          %344 = vmatpush1.msra.mxu0 0.0
          %345 = vmatprep.subr.mxu0 0.0
          %346 = vmatpush1.msra.mxu0 0.0
          %347 = vmatprep.subr.mxu0 0.0
          %348 = vmatpush1.msra.mxu0 0.0
          %349 = vmatprep.subr.mxu0 0.0
          %350 = vmatpush1.msra.mxu0 0.0
          %351 = vmatprep.subr.mxu0 0.0
          %352 = vmatpush1.msra.mxu0 0.0
          %353 = vmatprep.subr.mxu0 0.0
          %354 = vmatpush1.msra.mxu0 0.0
          %355 = vmatprep.subr.mxu0 0.0
          %356 = vmatpush1.msra.mxu0 0.0
          %357 = vmatprep.subr.mxu0 0.0
          %358 = vmatpush1.msra.mxu0 0.0
          %359 = vmatprep.subr.mxu0 0.0
          %360 = vmatpush1.msra.mxu0 0.0
          %361 = vmatprep.subr.mxu0 0.0
          %362 = vmatpush1.msra.mxu0 0.0
          %363 = vmatprep.subr.mxu0 0.0
          %364 = vmatpush1.msra.mxu0 0.0
          %365 = vmatprep.subr.mxu0 0.0
          %366 = vmatpush1.msra.mxu0 0.0
          %367 = vmatprep.subr.mxu0 0.0
          %368 = vmatpush1.msra.mxu0 0.0
          %369 = vmatprep.mubr.f32.mxu0 0.0
          %370 = vmatmul.mubr.f32.gmra.mrb[0].mxu0 %v301
          %v371 = vpop.f32.mrb[0].mxu0
          %v372 = vadd.f32 %v297, %v371
          %v373 = vpop.f32.mrb[0].mxu0
          %374 = vdwg.mxu0
          %s375 = scalar_lea.vmem %s205, 16
          %v376 = vld [vmem:[%s375] sm:$0xff]
          %377 = vrot.lane.b32.xlu0 %v216, 126
          %v378 = vpop.permute.xlu0 %377
          %v380 = vsel %vm223, %v376, 0
          %v382 = vsel %vm227, %v378, 0
          %384 = vmatprep.subr.mxu0 0.0
          %385 = vmatpush1.msra.mxu0 %v382
          %386 = vmatprep.subr.mxu0 0.0
          %387 = vmatpush1.msra.mxu0 0.0
          %388 = vmatprep.subr.mxu0 0.0
          %389 = vmatpush1.msra.mxu0 0.0
          %390 = vmatprep.subr.mxu0 0.0
          %391 = vmatpush1.msra.mxu0 0.0
          %392 = vmatprep.subr.mxu0 0.0
          %393 = vmatpush1.msra.mxu0 0.0
          %394 = vmatprep.subr.mxu0 0.0
          %395 = vmatpush1.msra.mxu0 0.0
          %396 = vmatprep.subr.mxu0 0.0
          %397 = vmatpush1.msra.mxu0 0.0
          %398 = vmatprep.subr.mxu0 0.0
          %399 = vmatpush1.msra.mxu0 0.0
          %400 = vmatprep.subr.mxu0 0.0
          %401 = vmatpush1.msra.mxu0 0.0
          %402 = vmatprep.subr.mxu0 0.0
          %403 = vmatpush1.msra.mxu0 0.0
          %404 = vmatprep.subr.mxu0 0.0
          %405 = vmatpush1.msra.mxu0 0.0
          %406 = vmatprep.subr.mxu0 0.0
          %407 = vmatpush1.msra.mxu0 0.0
          %408 = vmatprep.subr.mxu0 0.0
          %409 = vmatpush1.msra.mxu0 0.0
          %410 = vmatprep.subr.mxu0 0.0
          %411 = vmatpush1.msra.mxu0 0.0
          %412 = vmatprep.subr.mxu0 0.0
          %413 = vmatpush1.msra.mxu0 0.0
          %414 = vmatprep.subr.mxu0 0.0
          %415 = vmatpush1.msra.mxu0 0.0
          %416 = vmatprep.subr.mxu0 0.0
          %417 = vmatpush1.msra.mxu0 0.0
          %418 = vmatprep.subr.mxu0 0.0
          %419 = vmatpush1.msra.mxu0 0.0
          %420 = vmatprep.subr.mxu0 0.0
          %421 = vmatpush1.msra.mxu0 0.0
          %422 = vmatprep.subr.mxu0 0.0
          %423 = vmatpush1.msra.mxu0 0.0
          %424 = vmatprep.subr.mxu0 0.0
          %425 = vmatpush1.msra.mxu0 0.0
          %426 = vmatprep.subr.mxu0 0.0
          %427 = vmatpush1.msra.mxu0 0.0
          %428 = vmatprep.subr.mxu0 0.0
          %429 = vmatpush1.msra.mxu0 0.0
          %430 = vmatprep.subr.mxu0 0.0
          %431 = vmatpush1.msra.mxu0 0.0
          %432 = vmatprep.subr.mxu0 0.0
          %433 = vmatpush1.msra.mxu0 0.0
          %434 = vmatprep.subr.mxu0 0.0
          %435 = vmatpush1.msra.mxu0 0.0
          %436 = vmatprep.subr.mxu0 0.0
          %437 = vmatpush1.msra.mxu0 0.0
          %438 = vmatprep.subr.mxu0 0.0
          %439 = vmatpush1.msra.mxu0 0.0
          %440 = vmatprep.subr.mxu0 0.0
          %441 = vmatpush1.msra.mxu0 0.0
          %442 = vmatprep.subr.mxu0 0.0
          %443 = vmatpush1.msra.mxu0 0.0
          %444 = vmatprep.subr.mxu0 0.0
          %445 = vmatpush1.msra.mxu0 0.0
          %446 = vmatprep.subr.mxu0 0.0
          %447 = vmatpush1.msra.mxu0 0.0
          %448 = vmatprep.mubr.f32.mxu0 0.0
          %449 = vmatmul.mubr.f32.gmra.mrb[0].mxu0 %v380
          %v450 = vpop.f32.mrb[0].mxu0
          %v451 = vadd.f32 0.0, %v450
          %v452 = vpop.f32.mrb[0].mxu0
          %453 = vdwg.mxu0
          %v454 = vadd.f32 %v372, %v451
          %s455 = sadd.s32 %s209, 1
          %s456 = smul.u32 %s455, 4
          %s457 = scalar_lea.vmem %s173, %s456 [#allocation2]
          %v458 = vld [vmem:[%s457] sm:$0xf]
          %s459 = scalar_lea.vmem %s205, 24
          %v460 = vld [vmem:[%s459] sm:$0xff]
          %v462 = vsel %vm223, %v460, 0
          %v465 = vsel %vm227, %v458, 0
          %467 = vmatprep.subr.mxu0 0.0
          %468 = vmatpush1.msra.mxu0 %v465
          %469 = vmatprep.subr.mxu0 0.0
          %470 = vmatpush1.msra.mxu0 0.0
          %471 = vmatprep.subr.mxu0 0.0
          %472 = vmatpush1.msra.mxu0 0.0
          %473 = vmatprep.subr.mxu0 0.0
          %474 = vmatpush1.msra.mxu0 0.0
          %475 = vmatprep.subr.mxu0 0.0
          %476 = vmatpush1.msra.mxu0 0.0
          %477 = vmatprep.subr.mxu0 0.0
          %478 = vmatpush1.msra.mxu0 0.0
          %479 = vmatprep.subr.mxu0 0.0
          %480 = vmatpush1.msra.mxu0 0.0
          %481 = vmatprep.subr.mxu0 0.0
          %482 = vmatpush1.msra.mxu0 0.0
          %483 = vmatprep.subr.mxu0 0.0
          %484 = vmatpush1.msra.mxu0 0.0
          %485 = vmatprep.subr.mxu0 0.0
          %486 = vmatpush1.msra.mxu0 0.0
          %487 = vmatprep.subr.mxu0 0.0
          %488 = vmatpush1.msra.mxu0 0.0
          %489 = vmatprep.subr.mxu0 0.0
          %490 = vmatpush1.msra.mxu0 0.0
          %491 = vmatprep.subr.mxu0 0.0
          %492 = vmatpush1.msra.mxu0 0.0
          %493 = vmatprep.subr.mxu0 0.0
          %494 = vmatpush1.msra.mxu0 0.0
          %495 = vmatprep.subr.mxu0 0.0
          %496 = vmatpush1.msra.mxu0 0.0
          %497 = vmatprep.subr.mxu0 0.0
          %498 = vmatpush1.msra.mxu0 0.0
          %499 = vmatprep.subr.mxu0 0.0
          %500 = vmatpush1.msra.mxu0 0.0
          %501 = vmatprep.subr.mxu0 0.0
          %502 = vmatpush1.msra.mxu0 0.0
          %503 = vmatprep.subr.mxu0 0.0
          %504 = vmatpush1.msra.mxu0 0.0
          %505 = vmatprep.subr.mxu0 0.0
          %506 = vmatpush1.msra.mxu0 0.0
          %507 = vmatprep.subr.mxu0 0.0
          %508 = vmatpush1.msra.mxu0 0.0
          %509 = vmatprep.subr.mxu0 0.0
          %510 = vmatpush1.msra.mxu0 0.0
          %511 = vmatprep.subr.mxu0 0.0
          %512 = vmatpush1.msra.mxu0 0.0
          %513 = vmatprep.subr.mxu0 0.0
          %514 = vmatpush1.msra.mxu0 0.0
          %515 = vmatprep.subr.mxu0 0.0
          %516 = vmatpush1.msra.mxu0 0.0
          %517 = vmatprep.subr.mxu0 0.0
          %518 = vmatpush1.msra.mxu0 0.0
          %519 = vmatprep.subr.mxu0 0.0
          %520 = vmatpush1.msra.mxu0 0.0
          %521 = vmatprep.subr.mxu0 0.0
          %522 = vmatpush1.msra.mxu0 0.0
          %523 = vmatprep.subr.mxu0 0.0
          %524 = vmatpush1.msra.mxu0 0.0
          %525 = vmatprep.subr.mxu0 0.0
          %526 = vmatpush1.msra.mxu0 0.0
          %527 = vmatprep.subr.mxu0 0.0
          %528 = vmatpush1.msra.mxu0 0.0
          %529 = vmatprep.subr.mxu0 0.0
          %530 = vmatpush1.msra.mxu0 0.0
          %531 = vmatprep.mubr.f32.mxu0 0.0
          %532 = vmatmul.mubr.f32.gmra.mrb[0].mxu0 %v462
          %v533 = vpop.f32.mrb[0].mxu0
          %v534 = vadd.f32 0.0, %v533
          %v535 = vpop.f32.mrb[0].mxu0
          %536 = vdwg.mxu0
          %v537 = vadd.f32 %v454, %v534
          %s538 = scalar_lea.vmem %s205, 32
          %v539 = vld [vmem:[%s538] sm:$0xff]
          %540 = vrot.lane.b32.xlu0 %v458, 127
          %v541 = vpop.permute.xlu0 %540
          %v543 = vsel %vm223, %v539, 0
          %v545 = vsel %vm227, %v541, 0
          %547 = vmatprep.subr.mxu0 0.0
          %548 = vmatpush1.msra.mxu0 %v545
          %549 = vmatprep.subr.mxu0 0.0
          %550 = vmatpush1.msra.mxu0 0.0
          %551 = vmatprep.subr.mxu0 0.0
          %552 = vmatpush1.msra.mxu0 0.0
          %553 = vmatprep.subr.mxu0 0.0
          %554 = vmatpush1.msra.mxu0 0.0
          %555 = vmatprep.subr.mxu0 0.0
          %556 = vmatpush1.msra.mxu0 0.0
          %557 = vmatprep.subr.mxu0 0.0
          %558 = vmatpush1.msra.mxu0 0.0
          %559 = vmatprep.subr.mxu0 0.0
          %560 = vmatpush1.msra.mxu0 0.0
          %561 = vmatprep.subr.mxu0 0.0
          %562 = vmatpush1.msra.mxu0 0.0
          %563 = vmatprep.subr.mxu0 0.0
          %564 = vmatpush1.msra.mxu0 0.0
          %565 = vmatprep.subr.mxu0 0.0
          %566 = vmatpush1.msra.mxu0 0.0
          %567 = vmatprep.subr.mxu0 0.0
          %568 = vmatpush1.msra.mxu0 0.0
          %569 = vmatprep.subr.mxu0 0.0
          %570 = vmatpush1.msra.mxu0 0.0
          %571 = vmatprep.subr.mxu0 0.0
          %572 = vmatpush1.msra.mxu0 0.0
          %573 = vmatprep.subr.mxu0 0.0
          %574 = vmatpush1.msra.mxu0 0.0
          %575 = vmatprep.subr.mxu0 0.0
          %576 = vmatpush1.msra.mxu0 0.0
          %577 = vmatprep.subr.mxu0 0.0
          %578 = vmatpush1.msra.mxu0 0.0
          %579 = vmatprep.subr.mxu0 0.0
          %580 = vmatpush1.msra.mxu0 0.0
          %581 = vmatprep.subr.mxu0 0.0
          %582 = vmatpush1.msra.mxu0 0.0
          %583 = vmatprep.subr.mxu0 0.0
          %584 = vmatpush1.msra.mxu0 0.0
          %585 = vmatprep.subr.mxu0 0.0
          %586 = vmatpush1.msra.mxu0 0.0
          %587 = vmatprep.subr.mxu0 0.0
          %588 = vmatpush1.msra.mxu0 0.0
          %589 = vmatprep.subr.mxu0 0.0
          %590 = vmatpush1.msra.mxu0 0.0
          %591 = vmatprep.subr.mxu0 0.0
          %592 = vmatpush1.msra.mxu0 0.0
          %593 = vmatprep.subr.mxu0 0.0
          %594 = vmatpush1.msra.mxu0 0.0
          %595 = vmatprep.subr.mxu0 0.0
          %596 = vmatpush1.msra.mxu0 0.0
          %597 = vmatprep.subr.mxu0 0.0
          %598 = vmatpush1.msra.mxu0 0.0
          %599 = vmatprep.subr.mxu0 0.0
          %600 = vmatpush1.msra.mxu0 0.0
          %601 = vmatprep.subr.mxu0 0.0
          %602 = vmatpush1.msra.mxu0 0.0
          %603 = vmatprep.subr.mxu0 0.0
          %604 = vmatpush1.msra.mxu0 0.0
          %605 = vmatprep.subr.mxu0 0.0
          %606 = vmatpush1.msra.mxu0 0.0
          %607 = vmatprep.subr.mxu0 0.0
          %608 = vmatpush1.msra.mxu0 0.0
          %609 = vmatprep.subr.mxu0 0.0
          %610 = vmatpush1.msra.mxu0 0.0
          %611 = vmatprep.mubr.f32.mxu0 0.0
          %612 = vmatmul.mubr.f32.gmra.mrb[0].mxu0 %v543
          %v613 = vpop.f32.mrb[0].mxu0
          %v614 = vadd.f32 0.0, %v613
          %v615 = vpop.f32.mrb[0].mxu0
          %616 = vdwg.mxu0
          %v617 = vadd.f32 %v537, %v614
          %s618 = scalar_lea.vmem %s205, 40
          %v619 = vld [vmem:[%s618] sm:$0xff]
          %620 = vrot.lane.b32.xlu0 %v458, 126
          %v621 = vpop.permute.xlu0 %620
          %v623 = vsel %vm223, %v619, 0
          %v625 = vsel %vm227, %v621, 0
          %627 = vmatprep.subr.mxu0 0.0
          %628 = vmatpush1.msra.mxu0 %v625
          %629 = vmatprep.subr.mxu0 0.0
          %630 = vmatpush1.msra.mxu0 0.0
          %631 = vmatprep.subr.mxu0 0.0
          %632 = vmatpush1.msra.mxu0 0.0
          %633 = vmatprep.subr.mxu0 0.0
          %634 = vmatpush1.msra.mxu0 0.0
          %635 = vmatprep.subr.mxu0 0.0
          %636 = vmatpush1.msra.mxu0 0.0
          %637 = vmatprep.subr.mxu0 0.0
          %638 = vmatpush1.msra.mxu0 0.0
          %639 = vmatprep.subr.mxu0 0.0
          %640 = vmatpush1.msra.mxu0 0.0
          %641 = vmatprep.subr.mxu0 0.0
          %642 = vmatpush1.msra.mxu0 0.0
          %643 = vmatprep.subr.mxu0 0.0
          %644 = vmatpush1.msra.mxu0 0.0
          %645 = vmatprep.subr.mxu0 0.0
          %646 = vmatpush1.msra.mxu0 0.0
          %647 = vmatprep.subr.mxu0 0.0
          %648 = vmatpush1.msra.mxu0 0.0
          %649 = vmatprep.subr.mxu0 0.0
          %650 = vmatpush1.msra.mxu0 0.0
          %651 = vmatprep.subr.mxu0 0.0
          %652 = vmatpush1.msra.mxu0 0.0
          %653 = vmatprep.subr.mxu0 0.0
          %654 = vmatpush1.msra.mxu0 0.0
          %655 = vmatprep.subr.mxu0 0.0
          %656 = vmatpush1.msra.mxu0 0.0
          %657 = vmatprep.subr.mxu0 0.0
          %658 = vmatpush1.msra.mxu0 0.0
          %659 = vmatprep.subr.mxu0 0.0
          %660 = vmatpush1.msra.mxu0 0.0
          %661 = vmatprep.subr.mxu0 0.0
          %662 = vmatpush1.msra.mxu0 0.0
          %663 = vmatprep.subr.mxu0 0.0
          %664 = vmatpush1.msra.mxu0 0.0
          %665 = vmatprep.subr.mxu0 0.0
          %666 = vmatpush1.msra.mxu0 0.0
          %667 = vmatprep.subr.mxu0 0.0
          %668 = vmatpush1.msra.mxu0 0.0
          %669 = vmatprep.subr.mxu0 0.0
          %670 = vmatpush1.msra.mxu0 0.0
          %671 = vmatprep.subr.mxu0 0.0
          %672 = vmatpush1.msra.mxu0 0.0
          %673 = vmatprep.subr.mxu0 0.0
          %674 = vmatpush1.msra.mxu0 0.0
          %675 = vmatprep.subr.mxu0 0.0
          %676 = vmatpush1.msra.mxu0 0.0
          %677 = vmatprep.subr.mxu0 0.0
          %678 = vmatpush1.msra.mxu0 0.0
          %679 = vmatprep.subr.mxu0 0.0
          %680 = vmatpush1.msra.mxu0 0.0
          %681 = vmatprep.subr.mxu0 0.0
          %682 = vmatpush1.msra.mxu0 0.0
          %683 = vmatprep.subr.mxu0 0.0
          %684 = vmatpush1.msra.mxu0 0.0
          %685 = vmatprep.subr.mxu0 0.0
          %686 = vmatpush1.msra.mxu0 0.0
          %687 = vmatprep.subr.mxu0 0.0
          %688 = vmatpush1.msra.mxu0 0.0
          %689 = vmatprep.subr.mxu0 0.0
          %690 = vmatpush1.msra.mxu0 0.0
          %691 = vmatprep.mubr.f32.mxu0 0.0
          %692 = vmatmul.mubr.f32.gmra.mrb[0].mxu0 %v623
          %v693 = vpop.f32.mrb[0].mxu0
          %v694 = vadd.f32 0.0, %v693
          %v695 = vpop.f32.mrb[0].mxu0
          %696 = vdwg.mxu0
          %v697 = vadd.f32 %v617, %v694
          %s698 = sadd.s32 %s209, 2
          %s699 = smul.u32 %s698, 4
          %s700 = scalar_lea.vmem %s173, %s699 [#allocation2]
          %v701 = vld [vmem:[%s700] sm:$0xf]
          %s702 = scalar_lea.vmem %s205, 48
          %v703 = vld [vmem:[%s702] sm:$0xff]
          %v705 = vsel %vm223, %v703, 0
          %v708 = vsel %vm227, %v701, 0
          %710 = vmatprep.subr.mxu0 0.0
          %711 = vmatpush1.msra.mxu0 %v708
          %712 = vmatprep.subr.mxu0 0.0
          %713 = vmatpush1.msra.mxu0 0.0
          %714 = vmatprep.subr.mxu0 0.0
          %715 = vmatpush1.msra.mxu0 0.0
          %716 = vmatprep.subr.mxu0 0.0
          %717 = vmatpush1.msra.mxu0 0.0
          %718 = vmatprep.subr.mxu0 0.0
          %719 = vmatpush1.msra.mxu0 0.0
          %720 = vmatprep.subr.mxu0 0.0
          %721 = vmatpush1.msra.mxu0 0.0
          %722 = vmatprep.subr.mxu0 0.0
          %723 = vmatpush1.msra.mxu0 0.0
          %724 = vmatprep.subr.mxu0 0.0
          %725 = vmatpush1.msra.mxu0 0.0
          %726 = vmatprep.subr.mxu0 0.0
          %727 = vmatpush1.msra.mxu0 0.0
          %728 = vmatprep.subr.mxu0 0.0
          %729 = vmatpush1.msra.mxu0 0.0
          %730 = vmatprep.subr.mxu0 0.0
          %731 = vmatpush1.msra.mxu0 0.0
          %732 = vmatprep.subr.mxu0 0.0
          %733 = vmatpush1.msra.mxu0 0.0
          %734 = vmatprep.subr.mxu0 0.0
          %735 = vmatpush1.msra.mxu0 0.0
          %736 = vmatprep.subr.mxu0 0.0
          %737 = vmatpush1.msra.mxu0 0.0
          %738 = vmatprep.subr.mxu0 0.0
          %739 = vmatpush1.msra.mxu0 0.0
          %740 = vmatprep.subr.mxu0 0.0
          %741 = vmatpush1.msra.mxu0 0.0
          %742 = vmatprep.subr.mxu0 0.0
          %743 = vmatpush1.msra.mxu0 0.0
          %744 = vmatprep.subr.mxu0 0.0
          %745 = vmatpush1.msra.mxu0 0.0
          %746 = vmatprep.subr.mxu0 0.0
          %747 = vmatpush1.msra.mxu0 0.0
          %748 = vmatprep.subr.mxu0 0.0
          %749 = vmatpush1.msra.mxu0 0.0
          %750 = vmatprep.subr.mxu0 0.0
          %751 = vmatpush1.msra.mxu0 0.0
          %752 = vmatprep.subr.mxu0 0.0
          %753 = vmatpush1.msra.mxu0 0.0
          %754 = vmatprep.subr.mxu0 0.0
          %755 = vmatpush1.msra.mxu0 0.0
          %756 = vmatprep.subr.mxu0 0.0
          %757 = vmatpush1.msra.mxu0 0.0
          %758 = vmatprep.subr.mxu0 0.0
          %759 = vmatpush1.msra.mxu0 0.0
          %760 = vmatprep.subr.mxu0 0.0
          %761 = vmatpush1.msra.mxu0 0.0
          %762 = vmatprep.subr.mxu0 0.0
          %763 = vmatpush1.msra.mxu0 0.0
          %764 = vmatprep.subr.mxu0 0.0
          %765 = vmatpush1.msra.mxu0 0.0
          %766 = vmatprep.subr.mxu0 0.0
          %767 = vmatpush1.msra.mxu0 0.0
          %768 = vmatprep.subr.mxu0 0.0
          %769 = vmatpush1.msra.mxu0 0.0
          %770 = vmatprep.subr.mxu0 0.0
          %771 = vmatpush1.msra.mxu0 0.0
          %772 = vmatprep.subr.mxu0 0.0
          %773 = vmatpush1.msra.mxu0 0.0
          %774 = vmatprep.mubr.f32.mxu0 0.0
          %775 = vmatmul.mubr.f32.gmra.mrb[0].mxu0 %v705
          %v776 = vpop.f32.mrb[0].mxu0
          %v777 = vadd.f32 0.0, %v776
          %v778 = vpop.f32.mrb[0].mxu0
          %779 = vdwg.mxu0
          %v780 = vadd.f32 %v697, %v777
          %s781 = scalar_lea.vmem %s205, 56
          %v782 = vld [vmem:[%s781] sm:$0xff]
          %783 = vrot.lane.b32.xlu0 %v701, 127
          %v784 = vpop.permute.xlu0 %783
          %v786 = vsel %vm223, %v782, 0
          %v788 = vsel %vm227, %v784, 0
          %790 = vmatprep.subr.mxu0 0.0
          %791 = vmatpush1.msra.mxu0 %v788
          %792 = vmatprep.subr.mxu0 0.0
          %793 = vmatpush1.msra.mxu0 0.0
          %794 = vmatprep.subr.mxu0 0.0
          %795 = vmatpush1.msra.mxu0 0.0
          %796 = vmatprep.subr.mxu0 0.0
          %797 = vmatpush1.msra.mxu0 0.0
          %798 = vmatprep.subr.mxu0 0.0
          %799 = vmatpush1.msra.mxu0 0.0
          %800 = vmatprep.subr.mxu0 0.0
          %801 = vmatpush1.msra.mxu0 0.0
          %802 = vmatprep.subr.mxu0 0.0
          %803 = vmatpush1.msra.mxu0 0.0
          %804 = vmatprep.subr.mxu0 0.0
          %805 = vmatpush1.msra.mxu0 0.0
          %806 = vmatprep.subr.mxu0 0.0
          %807 = vmatpush1.msra.mxu0 0.0
          %808 = vmatprep.subr.mxu0 0.0
          %809 = vmatpush1.msra.mxu0 0.0
          %810 = vmatprep.subr.mxu0 0.0
          %811 = vmatpush1.msra.mxu0 0.0
          %812 = vmatprep.subr.mxu0 0.0
          %813 = vmatpush1.msra.mxu0 0.0
          %814 = vmatprep.subr.mxu0 0.0
          %815 = vmatpush1.msra.mxu0 0.0
          %816 = vmatprep.subr.mxu0 0.0
          %817 = vmatpush1.msra.mxu0 0.0
          %818 = vmatprep.subr.mxu0 0.0
          %819 = vmatpush1.msra.mxu0 0.0
          %820 = vmatprep.subr.mxu0 0.0
          %821 = vmatpush1.msra.mxu0 0.0
          %822 = vmatprep.subr.mxu0 0.0
          %823 = vmatpush1.msra.mxu0 0.0
          %824 = vmatprep.subr.mxu0 0.0
          %825 = vmatpush1.msra.mxu0 0.0
          %826 = vmatprep.subr.mxu0 0.0
          %827 = vmatpush1.msra.mxu0 0.0
          %828 = vmatprep.subr.mxu0 0.0
          %829 = vmatpush1.msra.mxu0 0.0
          %830 = vmatprep.subr.mxu0 0.0
          %831 = vmatpush1.msra.mxu0 0.0
          %832 = vmatprep.subr.mxu0 0.0
          %833 = vmatpush1.msra.mxu0 0.0
          %834 = vmatprep.subr.mxu0 0.0
          %835 = vmatpush1.msra.mxu0 0.0
          %836 = vmatprep.subr.mxu0 0.0
          %837 = vmatpush1.msra.mxu0 0.0
          %838 = vmatprep.subr.mxu0 0.0
          %839 = vmatpush1.msra.mxu0 0.0
          %840 = vmatprep.subr.mxu0 0.0
          %841 = vmatpush1.msra.mxu0 0.0
          %842 = vmatprep.subr.mxu0 0.0
          %843 = vmatpush1.msra.mxu0 0.0
          %844 = vmatprep.subr.mxu0 0.0
          %845 = vmatpush1.msra.mxu0 0.0
          %846 = vmatprep.subr.mxu0 0.0
          %847 = vmatpush1.msra.mxu0 0.0
          %848 = vmatprep.subr.mxu0 0.0
          %849 = vmatpush1.msra.mxu0 0.0
          %850 = vmatprep.subr.mxu0 0.0
          %851 = vmatpush1.msra.mxu0 0.0
          %852 = vmatprep.subr.mxu0 0.0
          %853 = vmatpush1.msra.mxu0 0.0
          %854 = vmatprep.mubr.f32.mxu0 0.0
          %855 = vmatmul.mubr.f32.gmra.mrb[0].mxu0 %v786
          %v856 = vpop.f32.mrb[0].mxu0
          %v857 = vadd.f32 0.0, %v856
          %v858 = vpop.f32.mrb[0].mxu0
          %859 = vdwg.mxu0
          %v860 = vadd.f32 %v780, %v857
          %s861 = scalar_lea.vmem %s205, 64
          %v862 = vld [vmem:[%s861] sm:$0xff]
          %863 = vrot.lane.b32.xlu0 %v701, 126
          %v864 = vpop.permute.xlu0 %863
          %v866 = vsel %vm223, %v862, 0
          %v868 = vsel %vm227, %v864, 0
          %870 = vmatprep.subr.mxu0 0.0
          %871 = vmatpush1.msra.mxu0 %v868
          %872 = vmatprep.subr.mxu0 0.0
          %873 = vmatpush1.msra.mxu0 0.0
          %874 = vmatprep.subr.mxu0 0.0
          %875 = vmatpush1.msra.mxu0 0.0
          %876 = vmatprep.subr.mxu0 0.0
          %877 = vmatpush1.msra.mxu0 0.0
          %878 = vmatprep.subr.mxu0 0.0
          %879 = vmatpush1.msra.mxu0 0.0
          %880 = vmatprep.subr.mxu0 0.0
          %881 = vmatpush1.msra.mxu0 0.0
          %882 = vmatprep.subr.mxu0 0.0
          %883 = vmatpush1.msra.mxu0 0.0
          %884 = vmatprep.subr.mxu0 0.0
          %885 = vmatpush1.msra.mxu0 0.0
          %886 = vmatprep.subr.mxu0 0.0
          %887 = vmatpush1.msra.mxu0 0.0
          %888 = vmatprep.subr.mxu0 0.0
          %889 = vmatpush1.msra.mxu0 0.0
          %890 = vmatprep.subr.mxu0 0.0
          %891 = vmatpush1.msra.mxu0 0.0
          %892 = vmatprep.subr.mxu0 0.0
          %893 = vmatpush1.msra.mxu0 0.0
          %894 = vmatprep.subr.mxu0 0.0
          %895 = vmatpush1.msra.mxu0 0.0
          %896 = vmatprep.subr.mxu0 0.0
          %897 = vmatpush1.msra.mxu0 0.0
          %898 = vmatprep.subr.mxu0 0.0
          %899 = vmatpush1.msra.mxu0 0.0
          %900 = vmatprep.subr.mxu0 0.0
          %901 = vmatpush1.msra.mxu0 0.0
          %902 = vmatprep.subr.mxu0 0.0
          %903 = vmatpush1.msra.mxu0 0.0
          %904 = vmatprep.subr.mxu0 0.0
          %905 = vmatpush1.msra.mxu0 0.0
          %906 = vmatprep.subr.mxu0 0.0
          %907 = vmatpush1.msra.mxu0 0.0
          %908 = vmatprep.subr.mxu0 0.0
          %909 = vmatpush1.msra.mxu0 0.0
          %910 = vmatprep.subr.mxu0 0.0
          %911 = vmatpush1.msra.mxu0 0.0
          %912 = vmatprep.subr.mxu0 0.0
          %913 = vmatpush1.msra.mxu0 0.0
          %914 = vmatprep.subr.mxu0 0.0
          %915 = vmatpush1.msra.mxu0 0.0
          %916 = vmatprep.subr.mxu0 0.0
          %917 = vmatpush1.msra.mxu0 0.0
          %918 = vmatprep.subr.mxu0 0.0
          %919 = vmatpush1.msra.mxu0 0.0
          %920 = vmatprep.subr.mxu0 0.0
          %921 = vmatpush1.msra.mxu0 0.0
          %922 = vmatprep.subr.mxu0 0.0
          %923 = vmatpush1.msra.mxu0 0.0
          %924 = vmatprep.subr.mxu0 0.0
          %925 = vmatpush1.msra.mxu0 0.0
          %926 = vmatprep.subr.mxu0 0.0
          %927 = vmatpush1.msra.mxu0 0.0
          %928 = vmatprep.subr.mxu0 0.0
          %929 = vmatpush1.msra.mxu0 0.0
          %930 = vmatprep.subr.mxu0 0.0
          %931 = vmatpush1.msra.mxu0 0.0
          %932 = vmatprep.subr.mxu0 0.0
          %933 = vmatpush1.msra.mxu0 0.0
          %934 = vmatprep.mubr.f32.mxu0 0.0
          %935 = vmatmul.mubr.f32.gmra.mrb[0].mxu0 %v866
          %v936 = vpop.f32.mrb[0].mxu0
          %v937 = vadd.f32 0.0, %v936
          %v938 = vpop.f32.mrb[0].mxu0
          %939 = vdwg.mxu0
          %v940 = vadd.f32 %v860, %v937
          %s941 = smul.u32 %s209, 8
          %s942 = scalar_lea.vmem %s198, %s941 [#allocation5]
          %vm943 = vcmask 113664
          %944 = vst.msk [vmem:[%s942] sm:$0xff] %vm943, %v940
        $region37: #{tpu_custom_call.1} parent=27 // loop_footer
          %s213 = sadd.s32 1, %s209
        $region38: #{tpu_custom_call.1} parent=27 // loop_footer_branch
          %208 = sbr.rel target = $region34
        $region39: #{tpu_custom_call.1} parent=27 // loop_exit
          _
        %p945 = scmp.eq.s32.totalorder %s24, 1
        // Predicated region
        $region40: #{tpu_custom_call.1} parent=27 // pred_check
          %p946 = pneg %p945
        $region41: #{tpu_custom_call.1} parent=27 // pred_check_branch
          %948 = sbr.rel (%p946) target = $region43
        $region42: #{tpu_custom_call.1} parent=27 // pred_region
          %v949 = vld [vmem:[%s198] sm:$0xff]
          %v950 = vld [vmem:[%s198 + $0x8] sm:$0xff]
          %v951 = vld [vmem:[%s198 + $0x10] sm:$0xff]
          %v952 = vld [vmem:[%s198 + $0x18] sm:$0xff]
          %v953 = vld [vmem:[%s198 + $0x20] sm:$0xff]
          %v954 = vld [vmem:[%s198 + $0x28] sm:$0xff]
          %v955 = vld [vmem:[%s198 + $0x30] sm:$0xff]
          %v956 = vld [vmem:[%s198 + $0x38] sm:$0xff]
          %v957 = vld [vmem:[%s198 + $0x40] sm:$0xff]
          %v958 = vld [vmem:[%s198 + $0x48] sm:$0xff]
          %v959 = vld [vmem:[%s198 + $0x50] sm:$0xff]
          %v960 = vld [vmem:[%s198 + $0x58] sm:$0xff]
          %v961 = vld [vmem:[%s198 + $0x60] sm:$0xff]
          %v962 = vld [vmem:[%s198 + $0x68] sm:$0xff]
          %v963 = vmul.f32 %v949, 1.442695
          %v964 = vpow.pop %v963
          %v965 = vmul.f32 %v950, 1.442695
          %v966 = vpow.pop %v965
          %v967 = vmul.f32 %v951, 1.442695
          %v968 = vpow.pop %v967
          %v969 = vmul.f32 %v952, 1.442695
          %v970 = vpow.pop %v969
          %v971 = vmul.f32 %v953, 1.442695
          %v972 = vpow.pop %v971
          %v973 = vmul.f32 %v954, 1.442695
          %v974 = vpow.pop %v973
          %v975 = vmul.f32 %v955, 1.442695
          %v976 = vpow.pop %v975
          %v977 = vmul.f32 %v956, 1.442695
          %v978 = vpow.pop %v977
          %v979 = vmul.f32 %v957, 1.442695
          %v980 = vpow.pop %v979
          %v981 = vmul.f32 %v958, 1.442695
          %v982 = vpow.pop %v981
          %v983 = vmul.f32 %v959, 1.442695
          %v984 = vpow.pop %v983
          %v985 = vmul.f32 %v960, 1.442695
          %v986 = vpow.pop %v985
          %v987 = vmul.f32 %v961, 1.442695
          %v988 = vpow.pop %v987
          %v989 = vmul.f32 %v962, 1.442695
          %v990 = vpow.pop %v989
          %vm991 = vcmask 113664
          %992 = vst.msk [vmem:[%s198] sm:$0xff] %vm991, %v964
          %993 = vst.msk [vmem:[%s198 + $0x8] sm:$0xff] %vm991, %v966
          %994 = vst.msk [vmem:[%s198 + $0x10] sm:$0xff] %vm991, %v968
          %995 = vst.msk [vmem:[%s198 + $0x18] sm:$0xff] %vm991, %v970
          %996 = vst.msk [vmem:[%s198 + $0x20] sm:$0xff] %vm991, %v972
          %997 = vst.msk [vmem:[%s198 + $0x28] sm:$0xff] %vm991, %v974
          %998 = vst.msk [vmem:[%s198 + $0x30] sm:$0xff] %vm991, %v976
          %999 = vst.msk [vmem:[%s198 + $0x38] sm:$0xff] %vm991, %v978
          %1000 = vst.msk [vmem:[%s198 + $0x40] sm:$0xff] %vm991, %v980
          %1001 = vst.msk [vmem:[%s198 + $0x48] sm:$0xff] %vm991, %v982
          %1002 = vst.msk [vmem:[%s198 + $0x50] sm:$0xff] %vm991, %v984
          %1003 = vst.msk [vmem:[%s198 + $0x58] sm:$0xff] %vm991, %v986
          %1004 = vst.msk [vmem:[%s198 + $0x60] sm:$0xff] %vm991, %v988
          %1005 = vst.msk [vmem:[%s198 + $0x68] sm:$0xff] %vm991, %v990
        $region43: #{tpu_custom_call.1} parent=27 // pred_fallthru
          _
        %s1006 = sand.u32 %s99, 1
        %s1007 = scalar_lea.sflag [#allocation4], %s1006
        %s1008 = sand.u32 %s99, 1
        %s1009 = smul.addr %s1008, 112
        %s1010 = scalar_lea.vmem [#allocation5], %s1009
        // Predicated region
        $region44: #{tpu_custom_call.1} parent=27 // pred_check
          %p1011 = pneg %p109
        $region45: #{tpu_custom_call.1} parent=27 // pred_check_branch
          %1013 = sbr.rel (%p1011) target = $region47
        $region46: #{tpu_custom_call.1} parent=27 // pred_region
          %s1014 = smul.u32 %s23, 2
          %s1015 = sadd.s32 %s1014, %s24
          %s1017 = ssub.s32 1792, 1792
          %1018 = vsyncadd %s1007, %s1017
          %s1019 = smul.addr %s1015, 14
          %s1020 = smul.addr %s1019, 128
          %s1021 = scalar_lea.hbm %s2, %s1020
          %s1022 = sshll.u32 %s1010, 4
          %s1023 = int_to_ptr.vmem [resolvable:$true] %s1022
          %1028 = dma.vmem_to_hbm [thread:$0]  %s1023, 1792, %s1021, %s1007, 128, 128, 8
        $region47: #{tpu_custom_call.1} parent=27 // pred_fallthru
          _
      $region28: #{tpu_custom_call.1} parent=5 // pred_fallthru
        _
      %p1029 = scmp.le.s32.totalorder 2, %s14
      // Predicated region
      $region48: #{tpu_custom_call.1} parent=5 // pred_check
        %p1030 = pneg %p1029
      $region49: #{tpu_custom_call.1} parent=5 // pred_check_branch
        %1032 = sbr.rel (%p1030) target = $region51
      $region50: #{tpu_custom_call.1} parent=5 // pred_region
        %s1033 = ssub.s32 %s14, 2
        // Predicated region
        $region52: #{tpu_custom_call.1} parent=50 // pred_check
          %p1034 = pneg %p115
        $region53: #{tpu_custom_call.1} parent=50 // pred_check_branch
          %1036 = sbr.rel (%p1034) target = $region55
        $region54: #{tpu_custom_call.1} parent=50 // pred_region
          %s1037 = sand.u32 %s100, 1
          %s1038 = scalar_lea.sflag [#allocation4], %s1037
          %s1039 = sand.u32 %s100, 1
          %s1040 = smul.addr %s1039, 112
          %s1041 = scalar_lea.vmem [#allocation5], %s1040
          %1042 = dma.done %s1038, 1792
        $region55: #{tpu_custom_call.1} parent=50 // pred_fallthru
          _
      $region51: #{tpu_custom_call.1} parent=5 // pred_fallthru
        _
    $region6: #{tpu_custom_call.1} parent=1 // loop_footer
      %s18 = sadd.s32 1, %s14
    $region7: #{tpu_custom_call.1} parent=1 // loop_footer_branch
      %13 = sbr.rel target = $region3
    $region8: #{tpu_custom_call.1} parent=1 // loop_exit
      _
    %1043 = vsyncpa [#allocation3], 1
    %s1044 = scalar_lea.sflag [#allocation3], 1
    %1045 = vsyncpa %s1044, 1
    %1046 = vsyncpa [#allocation4], 1
    %s1047 = scalar_lea.sflag [#allocation4], 1
    %1048 = vsyncpa %s1047, 1

</llo_original>
